<compile_context>
chip_gen: v7x
topology: tpu7x:2x2x1
jax: 0.10.0
libtpu: 0.0.40
codegen_flags: <defaults>
</compile_context>

<pallas_src>
import functools
import numpy as np
import jax
import jax.numpy as jnp
from jax import lax
from jax.experimental import pallas as pl
from jax.experimental.pallas import tpu as pltpu

F32 = jnp.float32
BF16 = jnp.bfloat16
_BN_EPS = 1e-5


# ----------------------------- small helpers -----------------------------

def _round_up(x, m):
    return ((x + m - 1) // m) * m


def _pick_tm(M):
    # Row tile for matmul-style kernels: several grid steps for large M (pipelining +
    # megacore), a single 8-aligned block for small M.
    return 256 if M >= 512 else _round_up(M, 8)


def _erf(x):
    # Abramowitz & Stegun 7.1.26 (|err| < 1.5e-7): exact-erf GELU surrogate that only needs
    # exp / mul / add, all of which lower cleanly inside Mosaic kernels.
    a1, a2, a3, a4, a5 = 0.254829592, -0.284496736, 1.421413741, -1.453152027, 1.061405429
    p = 0.3275911
    sgn = jnp.where(x >= 0.0, 1.0, -1.0)
    ax = jnp.abs(x)
    t = 1.0 / (1.0 + p * ax)
    poly = ((((a5 * t + a4) * t + a3) * t + a2) * t + a1) * t
    return sgn * (1.0 - poly * jnp.exp(-ax * ax))


def _apply_act(y, act):
    if act == "relu":
        return jnp.maximum(y, 0.0)
    if act == "gelu":
        return 0.5 * y * (1.0 + _erf(y * 0.7071067811865476))
    return y


# ----------------------------- Pallas kernels -----------------------------

def _mm_kernel(*refs, act, has_ln, ln_eps, has_res):
    # Optional channel LayerNorm  ->  bf16 matmul  ->  BN scale/bias + act  ->  optional
    # residual add.  Ref order: x, [ln_gamma, ln_beta], w, scale, bias, [res], out.
    idx = 0
    x_ref = refs[idx]; idx += 1
    if has_ln:
        g_ref, bln_ref = refs[idx], refs[idx + 1]; idx += 2
    w_ref, s_ref, b_ref = refs[idx], refs[idx + 1], refs[idx + 2]; idx += 3
    r_ref = None
    if has_res:
        r_ref = refs[idx]; idx += 1
    o_ref = refs[idx]

    x = x_ref[...]
    if has_ln:
        C = x.shape[1]
        mean = jnp.mean(x, axis=1, keepdims=True)
        d = x - mean
        var = jnp.sum(d * d, axis=1, keepdims=True) * (1.0 / (C - 1))   # torch unbiased var
        x = (d * lax.rsqrt(var + ln_eps)) * g_ref[...] + bln_ref[...]
    acc = jnp.dot(x.astype(BF16), w_ref[...], preferred_element_type=jnp.float32)
    y = _apply_act(acc * s_ref[...] + b_ref[...], act)
    if has_res:
        y = y + r_ref[...]
    o_ref[...] = y.astype(o_ref.dtype)


@functools.lru_cache(maxsize=None)
def _mm_call(M, Cin, Cout, act, has_ln, ln_eps, has_res):
    tm = _pick_tm(M)
    Mp = _round_up(M, tm)
    kern = functools.partial(_mm_kernel, act=act, has_ln=has_ln, ln_eps=ln_eps,
                             has_res=has_res)
    in_specs = [pl.BlockSpec((tm, Cin), lambda i: (i, 0))]
    if has_ln:
        in_specs += [pl.BlockSpec((1, Cin), lambda i: (0, 0)),
                     pl.BlockSpec((1, Cin), lambda i: (0, 0))]
    in_specs += [pl.BlockSpec((Cin, Cout), lambda i: (0, 0)),
                 pl.BlockSpec((1, Cout), lambda i: (0, 0)),
                 pl.BlockSpec((1, Cout), lambda i: (0, 0))]
    if has_res:
        in_specs.append(pl.BlockSpec((tm, Cout), lambda i: (i, 0)))
    f = pl.pallas_call(
        kern,
        out_shape=jax.ShapeDtypeStruct((Mp, Cout), F32),
        grid_spec=pltpu.PrefetchScalarGridSpec(
            num_scalar_prefetch=0,
            grid=(Mp // tm,),
            in_specs=in_specs,
            out_specs=pl.BlockSpec((tm, Cout), lambda i: (i, 0)),
        ),
        compiler_params=pltpu.CompilerParams(dimension_semantics=("parallel",)),
    )
    return jax.jit(f), Mp


def matmul_bias_act(xm, w_bf16, scale, bias, act, ln=None, residual=None):
    M, Cin = xm.shape
    Cout = w_bf16.shape[1]
    has_ln = ln is not None
    has_res = residual is not None
    ln_eps = float(ln[2]) if has_ln else 0.0
    call, Mp = _mm_call(M, Cin, Cout, act, has_ln, ln_eps, has_res)
    if Mp != M:
        xm = jnp.pad(xm, ((0, Mp - M), (0, 0)))
        if has_res:
            residual = jnp.pad(residual, ((0, Mp - M), (0, 0)))
    args = [xm]
    if has_ln:
        args += [ln[0].reshape(1, Cin), ln[1].reshape(1, Cin)]
    args += [w_bf16, scale.reshape(1, Cout), bias.reshape(1, Cout)]
    if has_res:
        args.append(residual)
    y = call(*args)
    return y[:M] if Mp != M else y


def _mm2_kernel(x_ref, w1_ref, s1_ref, b1_ref, w2_ref, s2_ref, b2_ref, o_ref, *, act1, act2):
    # Fused double matmul: (x @ w1)*s1+b1 -> act1 -> (@ w2)*s2+b2 -> act2.
    x = x_ref[...].astype(BF16)
    y = jnp.dot(x, w1_ref[...], preferred_element_type=jnp.float32)
    y = _apply_act(y * s1_ref[...] + b1_ref[...], act1)
    z = jnp.dot(y.astype(BF16), w2_ref[...], preferred_element_type=jnp.float32)
    z = _apply_act(z * s2_ref[...] + b2_ref[...], act2)
    o_ref[...] = z.astype(o_ref.dtype)


@functools.lru_cache(maxsize=None)
def _mm2_call(M, K1, C1, C2, act1, act2):
    tm = _pick_tm(M)
    Mp = _round_up(M, tm)
    kern = functools.partial(_mm2_kernel, act1=act1, act2=act2)
    f = pl.pallas_call(
        kern,
        out_shape=jax.ShapeDtypeStruct((Mp, C2), F32),
        grid_spec=pltpu.PrefetchScalarGridSpec(
            num_scalar_prefetch=0,
            grid=(Mp // tm,),
            in_specs=[pl.BlockSpec((tm, K1), lambda i: (i, 0)),
                      pl.BlockSpec((K1, C1), lambda i: (0, 0)),
                      pl.BlockSpec((1, C1), lambda i: (0, 0)),
                      pl.BlockSpec((1, C1), lambda i: (0, 0)),
                      pl.BlockSpec((C1, C2), lambda i: (0, 0)),
                      pl.BlockSpec((1, C2), lambda i: (0, 0)),
                      pl.BlockSpec((1, C2), lambda i: (0, 0))],
            out_specs=pl.BlockSpec((tm, C2), lambda i: (i, 0)),
        ),
        compiler_params=pltpu.CompilerParams(dimension_semantics=("parallel",)),
    )
    return jax.jit(f), Mp


def matmul2_bias_act(xm, w1, s1, b1, act1, w2, s2, b2, act2):
    M, K1 = xm.shape
    C1, C2 = w1.shape[1], w2.shape[1]
    call, Mp = _mm2_call(M, K1, C1, C2, act1, act2)
    if Mp != M:
        xm = jnp.pad(xm, ((0, Mp - M), (0, 0)))
    y = call(xm, w1, s1.reshape(1, C1), b1.reshape(1, C1),
             w2, s2.reshape(1, C2), b2.reshape(1, C2))
    return y[:M] if Mp != M else y


def _dsconv_kernel(xf_ref, dw_ref, ds_ref, db_ref, pw_ref, ps_ref, pb_ref, *rest,
                   W, dil, dw_act, pw_act, has_res):
    # Fused depthwise-3x3 (+BN+act) + pointwise-1x1 (+BN+act) [+ residual add].
    # xf: (1, L, Cin) = H-padded image flattened over (H, W) with a `dil` margin at both
    #     ends (resident across the h grid axis; taps are contiguous 2D slabs).
    # o : (tho*W, Cout) rows of the flattened (B*H*W, Cout) output.
    if has_res:
        r_ref, o_ref = rest
    else:
        (o_ref,) = rest
    h = pl.program_id(1)
    M, Cout = o_ref.shape
    Cin = xf_ref.shape[2]
    base = h * M                                      # flat row offset of this tile
    col = lax.broadcasted_iota(jnp.int32, (M, 1), 0) % W
    acc = jnp.zeros((M, Cin), jnp.float32)
    for dj in range(3):
        part = jnp.zeros((M, Cin), jnp.float32)
        for di in range(3):
            start = base + (di * W + dj) * dil
            patch = xf_ref[0, pl.ds(start, M), :]     # contiguous (M, Cin) slab
            part = part + patch * dw_ref[di, dj:dj + 1, :]
        off = (dj - 1) * dil                          # column shift of this tap column
        if off < 0:
            part = jnp.where(col >= -off, part, 0.0)
        elif off > 0:
            part = jnp.where(col < W - off, part, 0.0)
        acc = acc + part
    y = _apply_act(acc * ds_ref[...] + db_ref[...], dw_act)
    z = jnp.dot(y.astype(BF16), pw_ref[...], preferred_element_type=jnp.float32)
    z = _apply_act(z * ps_ref[...] + pb_ref[...], pw_act)
    if has_res:
        z = z + r_ref[...]
    o_ref[...] = z.astype(o_ref.dtype)


@functools.lru_cache(maxsize=None)
def _dsconv_call(B, H, W, Cin, Cout, dil, tho, dw_act, pw_act, has_res):
    Lf = (H + 2 * dil) * W + 2 * dil
    n_h = H // tho
    kern = functools.partial(_dsconv_kernel, W=W, dil=dil, dw_act=dw_act,
                             pw_act=pw_act, has_res=has_res)
    in_specs = [pl.BlockSpec((1, Lf, Cin), lambda b, h: (b, 0, 0)),
                pl.BlockSpec((3, 3, Cin), lambda b, h: (0, 0, 0)),
                pl.BlockSpec((1, Cin), lambda b, h: (0, 0)),
                pl.BlockSpec((1, Cin), lambda b, h: (0, 0)),
                pl.BlockSpec((Cin, Cout), lambda b, h: (0, 0)),
                pl.BlockSpec((1, Cout), lambda b, h: (0, 0)),
                pl.BlockSpec((1, Cout), lambda b, h: (0, 0))]
    if has_res:
        in_specs.append(pl.BlockSpec((tho * W, Cout), lambda b, h: (b * n_h + h, 0)))
    f = pl.pallas_call(
        kern,
        out_shape=jax.ShapeDtypeStruct((B * H * W, Cout), F32),
        grid_spec=pltpu.PrefetchScalarGridSpec(
            num_scalar_prefetch=0,
            grid=(B, n_h),
            in_specs=in_specs,
            out_specs=pl.BlockSpec((tho * W, Cout), lambda b, h: (b * n_h + h, 0)),
        ),
        compiler_params=pltpu.CompilerParams(dimension_semantics=("parallel", "parallel")),
    )
    return jax.jit(f)


def _vamm_kernel(xf_ref, dw_ref, ds_ref, db_ref, pw_ref, ps_ref, pb_ref,
                 g_ref, *br_refs, W, dils, pad):
    # Fused VAMM dilated branches: the shared input is read ONCE from HBM; every branch
    # (depthwise 3x3 at its own dilation + BN + ReLU + pointwise 1x1 + BN + ReLU) is
    # computed in VMEM, and both the per-branch outputs and the gather sum are emitted.
    # xf: (1, Lf, C) padded/flattened input with a `pad = max(dils)` margin.
    h = pl.program_id(1)
    M, C = g_ref.shape
    base = h * M
    col = lax.broadcasted_iota(jnp.int32, (M, 1), 0) % W
    # central tap = the unpadded input values of this tile (the `conv` term in gather)
    conv_tile = xf_ref[0, pl.ds(base + pad * W + pad, M), :]
    gacc = conv_tile.astype(jnp.float32)
    for bi, d in enumerate(dils):
        acc = jnp.zeros((M, C), jnp.float32)
        for dj in range(3):
            part = jnp.zeros((M, C), jnp.float32)
            for di in range(3):
                off = (pad + (di - 1) * d) * W + (dj - 1) * d + pad
                patch = xf_ref[0, pl.ds(base + off, M), :]
                row = bi * 9 + di * 3 + dj
                part = part + patch * dw_ref[row:row + 1, :]
            shift = (dj - 1) * d
            if shift < 0:
                part = jnp.where(col >= -shift, part, 0.0)
            elif shift > 0:
                part = jnp.where(col < W - shift, part, 0.0)
            acc = acc + part
        y = jnp.maximum(acc * ds_ref[bi:bi + 1, :] + db_ref[bi:bi + 1, :], 0.0)
        z = jnp.dot(y.astype(BF16), pw_ref[bi], preferred_element_type=jnp.float32)
        z = jnp.maximum(z * ps_ref[bi:bi + 1, :] + pb_ref[bi:bi + 1, :], 0.0)
        br_refs[bi][...] = z.astype(br_refs[bi].dtype)
        gacc = gacc + z
    g_ref[...] = gacc.astype(g_ref.dtype)


@functools.lru_cache(maxsize=None)
def _vamm_call(B, H, W, C, dils, tho, pad):
    nb = len(dils)
    Lf = (H + 2 * pad) * W + 2 * pad
    n_h = H // tho
    kern = functools.partial(_vamm_kernel, W=W, dils=dils, pad=pad)
    row_spec = pl.BlockSpec((tho * W, C), lambda b, h: (b * n_h + h, 0))
    f = pl.pallas_call(
        kern,
        out_shape=tuple(jax.ShapeDtypeStruct((B * H * W, C), F32) for _ in range(nb + 1)),
        grid_spec=pltpu.PrefetchScalarGridSpec(
            num_scalar_prefetch=0,
            grid=(B, n_h),
            in_specs=[pl.BlockSpec((1, Lf, C), lambda b, h: (b, 0, 0)),
                      pl.BlockSpec((nb * 9, C), lambda b, h: (0, 0)),
                      pl.BlockSpec((nb, C), lambda b, h: (0, 0)),
                      pl.BlockSpec((nb, C), lambda b, h: (0, 0)),
                      pl.BlockSpec((nb, C, C), lambda b, h: (0, 0, 0)),
                      pl.BlockSpec((nb, C), lambda b, h: (0, 0)),
                      pl.BlockSpec((nb, C), lambda b, h: (0, 0))],
            out_specs=tuple(row_spec for _ in range(nb + 1)),
        ),
        compiler_params=pltpu.CompilerParams(dimension_semantics=("parallel", "parallel")),
    )
    return jax.jit(f)


@functools.lru_cache(maxsize=None)
def _pick_tho(H, W, Cin):
    # Largest divisor of H whose row block (tho*W) is 8-aligned and fits a modest VMEM
    # budget.  Returns None when no 8-aligned tiling exists (tiny 2x2 maps -> fallback).
    # TODO(synk): at realistic resolutions the flat image block kept resident across the
    #             h axis must be re-budgeted for v7x's 64 MiB VMEM (tile the flat input).
    valid = [t for t in range(1, H + 1) if H % t == 0 and (t * W) % 8 == 0]
    if not valid:
        return None
    cap_rows = max(8, min(512, (2 << 20) // max(1, Cin * 4)))
    under = [t for t in valid if t * W <= cap_rows]
    return max(under) if under else min(valid)


def _dw_kernel(x_ref, w_ref, s_ref, b_ref, o_ref, *, dil, act):
    # Fallback depthwise 3x3 (whole padded image per batch step); used only for tiny maps.
    _, H, W, C = o_ref.shape
    acc = jnp.zeros((1, H, W, C), jnp.float32)
    for di in range(3):
        for dj in range(3):
            patch = x_ref[:, di * dil:di * dil + H, dj * dil:dj * dil + W, :]
            wt = w_ref[di, dj:dj + 1, :]                    # (1, C)
            acc = acc + patch * wt[None, None, :, :]
    y = acc * s_ref[...][None, None, :, :] + b_ref[...][None, None, :, :]
    o_ref[...] = _apply_act(y, act).astype(o_ref.dtype)


@functools.lru_cache(maxsize=None)
def _dw_call(B, H, W, C, dil, act):
    Hp, Wp = H + 2 * dil, W + 2 * dil
    kern = functools.partial(_dw_kernel, dil=dil, act=act)
    f = pl.pallas_call(
        kern,
        out_shape=jax.ShapeDtypeStruct((B, H, W, C), F32),
        grid_spec=pltpu.PrefetchScalarGridSpec(
            num_scalar_prefetch=0,
            grid=(B,),
            in_specs=[pl.BlockSpec((1, Hp, Wp, C), lambda b: (b, 0, 0, 0)),
                      pl.BlockSpec((3, 3, C), lambda b: (0, 0, 0)),
                      pl.BlockSpec((1, C), lambda b: (0, 0)),
                      pl.BlockSpec((1, C), lambda b: (0, 0))],
            out_specs=pl.BlockSpec((1, H, W, C), lambda b: (b, 0, 0, 0)),
        ),
        compiler_params=pltpu.CompilerParams(dimension_semantics=("parallel",)),
    )
    return jax.jit(f)


# ----------------------------- kernel wrappers -----------------------------

def conv1x1(x, w_bf16, scale, bias, act, ln=None, residual=None):
    B, H, W, C = x.shape
    Cout = w_bf16.shape[1]
    M = B * H * W
    xm = x.reshape(M, C)
    rm = residual.reshape(M, Cout) if residual is not None else None
    if M < 8:
        # pooled / tiny tensors: a Pallas launch is pure overhead
        if ln is not None:
            g, be, eps = ln
            mean = jnp.mean(xm, axis=1, keepdims=True)
            d = xm - mean
            var = jnp.sum(d * d, axis=1, keepdims=True) / (C - 1)
            xm = (d * lax.rsqrt(var + eps)) * g.reshape(1, C) + be.reshape(1, C)
        y = jnp.dot(xm.astype(BF16), w_bf16, preferred_element_type=F32)
        y = _apply_act(y * scale + bias, act)
        if rm is not None:
            y = y + rm
    else:
        y = matmul_bias_act(xm, w_bf16, scale, bias, act, ln=ln, residual=rm)
    return y.reshape(B, H, W, Cout)


def depthwise3x3(x, w, scale, bias, dil=1, act="relu"):
    B, H, W, C = x.shape
    xp = jnp.pad(x, ((0, 0), (dil, dil), (dil, dil), (0, 0)))
    return _dw_call(B, H, W, C, dil, act)(xp, w, scale.reshape(1, C), bias.reshape(1, C))


def dsconv_dwpw(x, dw_w, dw_s, dw_b, pw_w, pw_s, pw_b, dil, dw_act, pw_act, residual=None):
    """Depthwise-3x3(+BN+act) + pointwise-1x1(+BN+act) [+residual], fused when possible."""
    B, H, W, Cin = x.shape
    Cout = pw_w.shape[1]
    tho = _pick_tho(H, W, Cin)
    if tho is not None:
        # H-padded image, flattened over (H, W) with a dil margin at both ends.
        xp = jnp.pad(x, ((0, 0), (dil, dil), (0, 0), (0, 0)))
        xf = xp.reshape(B, (H + 2 * dil) * W, Cin)
        xf = jnp.pad(xf, ((0, 0), (dil, dil), (0, 0)))
        args = [xf, dw_w, dw_s.reshape(1, Cin), dw_b.reshape(1, Cin),
                pw_w, pw_s.reshape(1, Cout), pw_b.reshape(1, Cout)]
        if residual is not None:
            args.append(residual.reshape(B * H * W, Cout))
        y = _dsconv_call(B, H, W, Cin, Cout, dil, tho, dw_act, pw_act,
                         residual is not None)(*args)
        return y.reshape(B, H, W, Cout)
    # Fallback for spatial sizes where no 8-aligned row tile exists (2x2 maps).
    y = depthwise3x3(x, dw_w, dw_s, dw_b, dil=dil, act=dw_act)
    M = B * H * W
    ym = y.reshape(M, Cin)
    rm = residual.reshape(M, Cout) if residual is not None else None
    if M < 8:
        z = jnp.dot(ym.astype(BF16), pw_w, preferred_element_type=F32)
        z = _apply_act(z * pw_s + pw_b, pw_act)
        if rm is not None:
            z = z + rm
    else:
        z = matmul_bias_act(ym, pw_w, pw_s, pw_b, pw_act, residual=rm)
    return z.reshape(B, H, W, Cout)


# ----------------------------- JAX glue -----------------------------

def bilinear_resize(x, out_h, out_w):
    # F.interpolate(mode='bilinear', align_corners=True)
    B, H, W, C = x.shape
    if H == out_h and W == out_w:
        return x

    def src(out_n, in_n):
        if out_n == 1:
            return jnp.zeros((1,), F32)
        return jnp.arange(out_n, dtype=F32) * ((in_n - 1) / (out_n - 1))

    sy, sx = src(out_h, H), src(out_w, W)
    y0 = jnp.clip(jnp.floor(sy).astype(jnp.int32), 0, H - 1)
    x0 = jnp.clip(jnp.floor(sx).astype(jnp.int32), 0, W - 1)
    y1 = jnp.minimum(y0 + 1, H - 1)
    x1 = jnp.minimum(x0 + 1, W - 1)
    wy = (sy - y0.astype(F32))[None, :, None, None]
    wx = (sx - x0.astype(F32))[None, None, :, None]
    top, bot = x[:, y0, :, :], x[:, y1, :, :]

    def hmix(v):
        return v[:, :, x0, :] * (1.0 - wx) + v[:, :, x1, :] * wx

    return hmix(top) * (1.0 - wy) + hmix(bot) * wy


class ParamGen:
    """Deterministic synthetic parameter generator."""

    def __init__(self, seed=0):
        self.key = jax.random.PRNGKey(seed)
        self.n = 0

    def take(self, shape, scale=0.05):
        self.n += 1
        k = jax.random.fold_in(self.key, self.n)
        return scale * jax.random.normal(k, shape, dtype=F32)


# ----------------------------- Modules -----------------------------

class ConvBNReLU:
    def __init__(self, pg, cin, cout, k=3, s=1, p=1, g=1, d=1, bias=False, bn=True, relu=True):
        self.k, self.s, self.p, self.g, self.d = k, s, p, g, d
        self.cin, self.cout = cin, cout
        self.act = "relu" if relu else "none"
        if k == 1:
            self.w = pg.take((cin, cout)).astype(BF16)      # matmul weight in bf16 (HBM + MXU)
        elif g == cin and cin == cout:
            self.w = pg.take((3, 3, cin))                   # depthwise taps stay f32 (VPU)
        else:
            self.w = pg.take((9 * cin, cout)).astype(BF16)  # full 3x3 via im2col
        cb = pg.take((cout,)) if bias else jnp.zeros((cout,), F32)
        if bn:
            # eval-mode BatchNorm at default init (gamma=1, beta=0, mean=0, var=1) folded in.
            # TODO(synk): re-fold from real running stats once a trained checkpoint is loaded.
            self.scale = jnp.full((cout,), 1.0 / np.sqrt(1.0 + _BN_EPS), F32)
            self.bias = self.scale * cb
        else:
            self.scale = jnp.ones((cout,), F32)
            self.bias = cb

    def __call__(self, x, residual=None):
        if self.k == 1:
            return conv1x1(x, self.w, self.scale, self.bias, self.act, residual=residual)
        if self.g == self.cin and self.cin == self.cout:
            return depthwise3x3(x, self.w, self.scale, self.bias, dil=self.d, act=self.act)
        # full 3x3 conv (stride 1, pad 1) via im2col + fused matmul/BN/ReLU kernel.
        # TODO(synk): do the im2col with shifted reads inside the kernel instead of
        #             materializing the 9C-wide tensor in HBM (only the 3->16 stem uses this).
        B, H, W, C = x.shape
        xp = jnp.pad(x, ((0, 0), (1, 1), (1, 1), (0, 0)))
        cols = [xp[:, di:di + H, dj:dj + W, :] for di in range(3) for dj in range(3)]
        xc = jnp.concatenate(cols, axis=-1).reshape(B * H * W, 9 * C)
        y = matmul_bias_act(xc, self.w, self.scale, self.bias, self.act)
        return y.reshape(B, H, W, self.cout)


class DSConv3x3:
    def __init__(self, pg, cin, cout, stride=1, dilation=1, relu=True):
        self.stride, self.dil = stride, dilation
        self.cin, self.cout = cin, cout
        self.dw = ConvBNReLU(pg, cin, cin, k=3, s=stride, p=dilation, d=dilation, g=cin)
        self.pw = ConvBNReLU(pg, cin, cout, k=1, s=1, p=0, relu=relu)
        if stride == 2:
            # Fold the depthwise taps into a block-diagonal (9*cin, cin) matrix so the whole
            # stride-2 DSConv runs as im2col + one fused double matmul on the MXU (only the
            # Ho x Wo output positions are ever computed).
            w = np.zeros((9 * cin, cin), np.float32)
            dwv = np.asarray(self.dw.w)
            idx = np.arange(cin)
            for t in range(9):
                w[t * cin + idx, idx] = dwv[t // 3, t % 3]
            self.dw_mat = jnp.asarray(w).astype(BF16)

    def __call__(self, x):
        if self.stride == 2:
            B, H, W, Cin = x.shape
            Ho, Wo = (H + 1) // 2, (W + 1) // 2
            xp = jnp.pad(x, ((0, 0), (1, 1), (1, 1), (0, 0)))
            cols = [xp[:, di:di + 2 * Ho:2, dj:dj + 2 * Wo:2, :]
                    for di in range(3) for dj in range(3)]
            xc = jnp.concatenate(cols, axis=-1).reshape(B * Ho * Wo, 9 * Cin)
            y = matmul2_bias_act(xc,
                                 self.dw_mat, self.dw.scale, self.dw.bias, "relu",
                                 self.pw.w, self.pw.scale, self.pw.bias, self.pw.act)
            return y.reshape(B, Ho, Wo, self.cout)
        return dsconv_dwpw(x, self.dw.w, self.dw.scale, self.dw.bias,
                           self.pw.w, self.pw.scale, self.pw.bias,
                           self.dil, "relu", self.pw.act)


class SalHead:
    def __init__(self, pg, cin):
        self.w = pg.take((cin, 1))
        self.b = pg.take((1,))

    def __call__(self, x):
        # Cout=1 would make every Pallas store a 1/128-lane masked vst; plain XLA is faster.
        y = jnp.einsum("bhwc,co->bhwo", x, self.w) + self.b
        return jax.nn.sigmoid(y)


class DSA:
    def __init__(self, pg, c):
        wb, bb = pg.take((c, c)), pg.take((c,))
        wc, bc = pg.take((c, c)), pg.take((c,))
        wd, bd = pg.take((c, c)), pg.take((c,))
        # concat the three sibling 1x1 convs into one lane-dense (C, 3C) matmul
        self.wkqv = jnp.concatenate([wb, wc, wd], axis=1).astype(BF16)
        self.bkqv = jnp.concatenate([bb, bc, bd], axis=0)
        self.we = pg.take((c, c)).astype(BF16)
        self.be = pg.take((c,))
        self.scale = jnp.ones((1,), F32)
        self.s_kqv = jnp.ones((3 * c,), F32)
        self.s_e = jnp.ones((c,), F32)
        self.c = c

    def __call__(self, x, ln=None, residual=None):
        # `ln` fuses the preceding channel-LayerNorm into the kqv matmul kernel;
        # `residual` fuses the outer skip connection into the output-conv kernel.
        B, H, W, C = x.shape
        n = H * W
        kqv = conv1x1(x, self.wkqv, self.s_kqv, self.bkqv, "none", ln=ln)
        key, query, value = kqv[..., :C], kqv[..., C:2 * C], kqv[..., 2 * C:]
        k = key.transpose(0, 3, 1, 2).reshape(B, C, n)
        q = query.transpose(0, 3, 1, 2).reshape(B, C, n)
        k = k / jnp.maximum(jnp.linalg.norm(k, axis=-1, keepdims=True), 1e-12)
        q = q / jnp.maximum(jnp.linalg.norm(q, axis=-1, keepdims=True), 1e-12)
        kq = jnp.sum(q * k, axis=-1)                          # (B, C)
        atten = jax.nn.softmax(kq * self.scale[0], axis=1)    # softmax over channels
        feat = value * atten[:, None, None, :]
        return conv1x1(feat, self.we, self.s_e, self.be, "none", residual=residual)


class LayerNormC:
    """Channel LayerNorm parameters (always fused into the following 1x1-conv kernel)."""

    def __init__(self, dim, eps=1e-8):
        self.gamma = jnp.ones((dim,), F32)
        self.beta = jnp.zeros((dim,), F32)
        self.eps = float(eps)

    @property
    def params(self):
        return (self.gamma, self.beta, self.eps)


class TransformerBlock:
    def __init__(self, pg, dim):
        self.norm1 = LayerNormC(dim)
        self.norm2 = LayerNormC(dim)
        self.dsa = DSA(pg, dim)
        self.w1 = pg.take((dim, dim * 4)).astype(BF16)
        self.wdw = pg.take((3, 3, dim * 4))
        self.w2 = pg.take((dim * 4, dim)).astype(BF16)
        self._ones4 = jnp.ones((dim * 4,), F32)
        self._zeros4 = jnp.zeros((dim * 4,), F32)
        self._ones_d = jnp.ones((dim,), F32)
        self._zeros_d = jnp.zeros((dim,), F32)

    def __call__(self, x):
        # x = x + dsa(norm1(x)) with norm1 and the residual fused into the DSA conv kernels
        x = self.dsa(x, ln=self.norm1.params, residual=x)
        # FFN: norm2 fused into the expand matmul; GELU in the matmul epilogue & depthwise;
        # the outer residual fused into the projection matmul epilogue.
        y = conv1x1(x, self.w1, self._ones4, self._zeros4, "gelu", ln=self.norm2.params)
        y = dsconv_dwpw(y, self.wdw, self._ones4, self._zeros4,
                        self.w2, self._ones_d, self._zeros_d,
                        1, "gelu", "none", residual=x)
        return y


class CCAM:
    def __init__(self, pg, c):
        # pooled 1x1 convs act on (B, C) rows -> plain JAX (Pallas launch is pure overhead)
        self.wk, self.bk = pg.take((c, c)), pg.take((c,))
        self.wq1, self.bq1 = pg.take((c, c)), pg.take((c,))
        self.wq2, self.bq2 = pg.take((c, c)), pg.take((c,))
        self.wpro = pg.take((c, c)).astype(BF16)
        self.bpro = pg.take((c,))
        self.s_pro = jnp.ones((c,), F32)
        self.scale = jnp.ones((1,), F32)
        self.heads = 4

    def __call__(self, f_h, f_l, f_g):
        B, H, W, C = f_l.shape
        hn, ch = self.heads, C // self.heads
        pool = lambda t: jnp.mean(t, axis=(1, 2))             # (B, C)
        relu = lambda t: jnp.maximum(t, 0.0)
        k = relu(pool(f_l) @ self.wk + self.bk).reshape(B * hn, ch, 1)
        q1 = relu(pool(f_g) @ self.wq1 + self.bq1).reshape(B * hn, ch, 1)
        q2 = relu(pool(f_h) @ self.wq2 + self.bq2).reshape(B * hn, ch, 1)
        v = f_l.transpose(0, 3, 1, 2).reshape(B * hn, ch, H * W)
        kT = k.transpose(0, 2, 1)
        atten = jnp.matmul(q1, kT) + jnp.matmul(q2, kT)       # tiny bmm (glue)
        atten = jax.nn.softmax(atten * self.scale[0], axis=-1)
        out = jnp.matmul(atten, v).reshape(B, C, H, W).transpose(0, 2, 3, 1)
        # `f_l + pro(out)` with the residual fused into the projection kernel epilogue.
        return conv1x1(out, self.wpro, self.s_pro, self.bpro, "none", residual=f_l)


class FGAM:
    def __init__(self, pg, c1, c2):
        self.conv1 = ConvBNReLU(pg, c1, c1, k=1, s=1, p=0, bn=False, relu=False)
        self.conv2 = ConvBNReLU(pg, c1, c1, k=1, s=1, p=0, bn=False, relu=False)
        w3, w5 = pg.take((c2, c1)), pg.take((c2, c1))
        self.w35 = jnp.concatenate([w3, w5], axis=1).astype(BF16)   # conv3 | conv5 share f_g
        self.s35 = jnp.ones((2 * c1,), F32)
        self.b35 = jnp.zeros((2 * c1,), F32)
        self.ccam = CCAM(pg, c1)
        self.conv4 = ConvBNReLU(pg, c1, c1, k=1, s=1, p=0, bn=False, relu=False)
        self.c1c = c1

    def __call__(self, f_h, f_l, f_g):
        B, H, W, C = f_l.shape
        c1 = self.c1c
        f_h = self.conv1(f_h)
        f_l2 = self.conv2(f_l)
        g35 = conv1x1(f_g, self.w35, self.s35, self.b35, "none")
        f_g3, f_g5 = g35[..., :c1], g35[..., c1:]
        w_f_l = self.ccam(f_h, f_l2, f_g3)
        f_hr = bilinear_resize(f_h, H, W)
        f_hr = self.conv4(f_hr, residual=w_f_l)                # conv4 + one fused residual
        f_g5 = bilinear_resize(f_g5, H, W)
        return f_hr + f_g5


class VAMM:
    def __init__(self, pg, channel, dilation_level=(1, 2, 4, 8), reduce_factor=4):
        self.planes = channel
        self.dlev = tuple(dilation_level)
        self.conv = DSConv3x3(pg, channel, channel, stride=1)
        self.branches = [DSConv3x3(pg, channel, channel, stride=1, dilation=d) for d in self.dlev]
        # Stacked branch parameters for the fused multi-branch kernel (reads `conv` once).
        self._bdw_w = jnp.concatenate([br.dw.w.reshape(9, channel) for br in self.branches],
                                      axis=0)                                   # (nb*9, C)
        self._bdw_s = jnp.stack([br.dw.scale for br in self.branches])          # (nb, C)
        self._bdw_b = jnp.stack([br.dw.bias for br in self.branches])
        self._bpw_w = jnp.stack([br.pw.w for br in self.branches])              # (nb, C, C) bf16
        self._bpw_s = jnp.stack([br.pw.scale for br in self.branches])
        self._bpw_b = jnp.stack([br.pw.bias for br in self.branches])
        self.fc1_w = pg.take((channel, channel))
        self.fc1_scale = jnp.full((channel,), 1.0 / np.sqrt(1.0 + _BN_EPS), F32)
        self.fc1_bias = jnp.zeros((channel,), F32)
        self.fc2_w = pg.take((channel, (len(self.dlev) + 1) * channel))
        self.fuse = ConvBNReLU(pg, channel, channel, k=1, s=1, p=0, relu=False)
        cr = channel // reduce_factor
        self.c0 = ConvBNReLU(pg, channel, cr, 1, 1, 0, bn=True, relu=True)
        self.c1 = DSConv3x3(pg, cr, cr, stride=1, dilation=2)
        self.c2 = DSConv3x3(pg, cr, cr, stride=1, dilation=4)
        self.c3_w = pg.take((cr, 1))

    def __call__(self, x):
        conv = self.conv(x)
        B, H, W, C = conv.shape
        tho = _pick_tho(H, W, C)
        if tho is not None:
            # Fused multi-branch kernel: reads `conv` from HBM once, emits every dilated
            # branch plus their gather sum (gather includes `conv` itself).
            pad = max(self.dlev)
            xp = jnp.pad(conv, ((0, 0), (pad, pad), (0, 0), (0, 0)))
            xf = xp.reshape(B, (H + 2 * pad) * W, C)
            xf = jnp.pad(xf, ((0, 0), (pad, pad), (0, 0)))
            outs = _vamm_call(B, H, W, C, self.dlev, tho, pad)(
                xf, self._bdw_w, self._bdw_s, self._bdw_b,
                self._bpw_w, self._bpw_s, self._bpw_b)
            gather = outs[0].reshape(B, H, W, C)
            brs = [o.reshape(B, H, W, C) for o in outs[1:]] + [conv]
        else:
            # tiny 2x2 maps: no 8-aligned row tiling exists -> per-branch fallback path
            brs = [br(conv) for br in self.branches] + [conv]
            gather = brs[0]
            for b in brs[1:]:
                gather = gather + b
        L = len(self.dlev) + 1
        # channel gate: GAP -> fc1(BN,ReLU) -> fc2 on (B, C) rows -> plain JAX (M=B is tiny)
        d = jnp.mean(gather, axis=(1, 2))                               # (B, C)
        d = jnp.maximum((d @ self.fc1_w) * self.fc1_scale + self.fc1_bias, 0.0)
        d = d @ self.fc2_w                                              # (B, L*C)
        d = d.reshape(B, L, self.planes)
        s = self.c2(self.c1(self.c0(gather)))
        s = jnp.einsum("bhwc,co->bhwo", s, self.c3_w)                   # (B,H,W,1), Cout=1 -> XLA
        f = jax.nn.softmax(d[:, :, None, None, :] * s[:, None, :, :, :], axis=1)
        fused = brs[0] * f[:, 0]
        for i in range(1, L):
            fused = fused + brs[i] * f[:, i]
        return self.fuse(fused, residual=x)                             # fuse conv + residual


class VAMMBackbone:
    def __init__(self, pg):
        self.l1 = [ConvBNReLU(pg, 3, 16, k=3, s=1, p=1), VAMM(pg, 16, [1, 2, 3])]
        self.l2 = [DSConv3x3(pg, 16, 32, stride=2), VAMM(pg, 32, [1, 2, 3])]
        self.l3 = [DSConv3x3(pg, 32, 64, stride=2)] + [VAMM(pg, 64, [1, 2, 3]) for _ in range(3)]
        self.l4 = [DSConv3x3(pg, 64, 96, stride=2)] + [VAMM(pg, 96, [1, 2, 3]) for _ in range(6)]
        self.l5 = [DSConv3x3(pg, 96, 128, stride=2)] + [VAMM(pg, 128, [1, 2]) for _ in range(3)]

    def __call__(self, x):
        def run(mods, t):
            for m in mods:
                t = m(t)
            return t
        o1 = run(self.l1, x)
        o2 = run(self.l2, o1)
        o3 = run(self.l3, o2)
        o4 = run(self.l4, o3)
        o5 = run(self.l5, o4)
        return o1, o2, o3, o4, o5


class GCRANet:
    def __init__(self, pg):
        self.backbone = VAMMBackbone(pg)
        # TODO(synk): pretrained backbone checkpoint (torch.load) replaced by deterministic synthetic init.
        self.transformer = [DSConv3x3(pg, 128, 128, stride=1),
                            TransformerBlock(pg, 128),
                            TransformerBlock(pg, 128)]
        self.prepare = ConvBNReLU(pg, 128, 128, k=1, s=1, p=0, relu=False, bn=False)
        self.fgam1 = FGAM(pg, 96, 128)
        self.fgam2 = FGAM(pg, 64, 128)
        self.fgam3 = FGAM(pg, 32, 128)
        self.fgam4 = FGAM(pg, 16, 128)
        self.fuse = [DSConv3x3(pg, 128, 96, dilation=1),
                     DSConv3x3(pg, 96, 64, dilation=2),
                     DSConv3x3(pg, 64, 32, dilation=2),
                     DSConv3x3(pg, 32, 16, dilation=2),
                     DSConv3x3(pg, 16, 16, dilation=2)]
        self.heads = [SalHead(pg, 128), SalHead(pg, 64), SalHead(pg, 32),
                      SalHead(pg, 16), SalHead(pg, 16)]

    def __call__(self, x):
        B, H, W, _ = x.shape
        s1, s2, s3, s4, s5 = self.backbone(x)
        s6 = s5
        for m in self.transformer:
            s6 = m(s6)
        f1 = self.fuse[0](self.prepare(s5))
        f2 = self.fuse[1](self.fgam1(f1, s4, s6))
        f3 = self.fuse[2](self.fgam2(f2, s3, s6))
        f4 = self.fuse[3](self.fgam3(f3, s2, s6))
        f5 = self.fuse[4](self.fgam4(f4, s1, s6))
        out_side1 = bilinear_resize(self.heads[0](s6), H, W)
        out_side2 = bilinear_resize(self.heads[1](f2), H, W)
        out_side3 = bilinear_resize(self.heads[2](f3), H, W)
        out_side4 = bilinear_resize(self.heads[3](f4), H, W)
        out_main = self.heads[4](f5)
        return out_main, out_side1, out_side2, out_side3, out_side4


if __name__ == "__main__":
    pg = ParamGen(seed=0)
    net = GCRANet(pg)

    # NHWC input; equivalent PyTorch input would be (2, 3, 32, 32) NCHW.
    x = jax.random.normal(jax.random.PRNGKey(0), (2, 32, 32, 3), dtype=F32)

    fwd = jax.jit(net.__call__)
    outs = fwd(x)
    outs = jax.block_until_ready(outs)

    expected = [(2, 32, 32, 1)] * 5
    for o, es in zip(outs, expected):
        assert o.shape == es, (o.shape, es)
        assert bool(jnp.all(jnp.isfinite(o)))
        assert bool(jnp.all((o >= 0.0) & (o <= 1.0)))   # sigmoid heads / bilinear of sigmoid
    print("KERNEL_OK")
</pallas_src>

<mosaic_0001>
module attributes {stable_mosaic.version = 11 : i64} {
  func.func @_mm_kernel(%arg0: i32, %arg1: memref<256x27xf32, #tpu.memory_space<vmem>>, %arg2: memref<27x16xbf16, #tpu.memory_space<vmem>>, %arg3: memref<1x16xf32, #tpu.memory_space<vmem>>, %arg4: memref<1x16xf32, #tpu.memory_space<vmem>>, %arg5: memref<256x16xf32, #tpu.memory_space<vmem>>) attributes {dimension_semantics = [#tpu.dimension_semantics<parallel>], iteration_bounds = array<i64: 8>, scalar_prefetch = 0 : i64, scratch_operands = 0 : i64, tpu.core_type = #tpu.core_type<tc>, window_params = [{transform_indices = @transform_0, window_bounds = array<i64: 256, 27>}, {pipeline_mode = #tpu.pipeline_mode<synchronous>, transform_indices = @transform_1, window_bounds = array<i64: 27, 16>}, {pipeline_mode = #tpu.pipeline_mode<synchronous>, transform_indices = @transform_2, window_bounds = array<i64: 1, 16>}, {pipeline_mode = #tpu.pipeline_mode<synchronous>, transform_indices = @transform_3, window_bounds = array<i64: 1, 16>}, {transform_indices = @transform_4, window_bounds = array<i64: 256, 16>}]} {
    %c0 = arith.constant 0 : index
    %c0_0 = arith.constant 0 : index
    %0 = vector.load %arg1[%c0, %c0_0] : memref<256x27xf32, #tpu.memory_space<vmem>>, vector<256x27xf32>
    %1 = arith.truncf %0 : vector<256x27xf32> to vector<256x27xbf16>
    %c0_1 = arith.constant 0 : index
    %c0_2 = arith.constant 0 : index
    %2 = vector.load %arg2[%c0_1, %c0_2] : memref<27x16xbf16, #tpu.memory_space<vmem>>, vector<27x16xbf16>
    %cst = arith.constant dense<0.000000e+00> : vector<256x16xf32>
    %3 = tpu.matmul %1, %2, %cst {dimension_numbers = #tpu.dot_dimension_numbers<[1], [0], [0], [1], [0, 0, 1, 1], [], []>} : vector<256x27xbf16>, vector<27x16xbf16>, vector<256x16xf32> -> vector<256x16xf32>
    %c0_3 = arith.constant 0 : index
    %c0_4 = arith.constant 0 : index
    %4 = vector.load %arg3[%c0_3, %c0_4] : memref<1x16xf32, #tpu.memory_space<vmem>>, vector<1x16xf32>
    %5 = vector.broadcast %4 : vector<1x16xf32> to vector<256x16xf32>
    %6 = arith.mulf %3, %5 : vector<256x16xf32>
    %c0_5 = arith.constant 0 : index
    %c0_6 = arith.constant 0 : index
    %7 = vector.load %arg4[%c0_5, %c0_6] : memref<1x16xf32, #tpu.memory_space<vmem>>, vector<1x16xf32>
    %8 = vector.broadcast %7 : vector<1x16xf32> to vector<256x16xf32>
    %9 = arith.addf %6, %8 : vector<256x16xf32>
    %cst_7 = arith.constant 0.000000e+00 : f32
    %10 = vector.broadcast %cst_7 : f32 to vector<256x16xf32>
    %11 = arith.maximumf %9, %10 : vector<256x16xf32>
    %c0_8 = arith.constant 0 : index
    %c0_9 = arith.constant 0 : index
    %12 = vector.load %arg5[%c0_8, %c0_9] : memref<256x16xf32, #tpu.memory_space<vmem>>, vector<256x16xf32>
    tpu.vector_store %arg5[%c0_8, %c0_9], %11 {strides = array<i32>} : memref<256x16xf32, #tpu.memory_space<vmem>>, vector<256x16xf32>,
    return
  }
  func.func @transform_0(%arg0: i32) -> (i32, i32) {
    %c0_i32 = arith.constant 0 : i32
    %c0_i32_0 = arith.constant 0 : i32
    return %arg0, %c0_i32 : i32, i32
  }
  func.func @transform_1(%arg0: i32) -> (i32, i32) {
    %c0_i32 = arith.constant 0 : i32
    %c0_i32_0 = arith.constant 0 : i32
    %c0_i32_1 = arith.constant 0 : i32
    return %c0_i32, %c0_i32_0 : i32, i32
  }
  func.func @transform_2(%arg0: i32) -> (i32, i32) {
    %c0_i32 = arith.constant 0 : i32
    %c0_i32_0 = arith.constant 0 : i32
    %c0_i32_1 = arith.constant 0 : i32
    return %c0_i32, %c0_i32_0 : i32, i32
  }
  func.func @transform_3(%arg0: i32) -> (i32, i32) {
    %c0_i32 = arith.constant 0 : i32
    %c0_i32_0 = arith.constant 0 : i32
    %c0_i32_1 = arith.constant 0 : i32
    return %c0_i32, %c0_i32_0 : i32, i32
  }
  func.func @transform_4(%arg0: i32) -> (i32, i32) {
    %c0_i32 = arith.constant 0 : i32
    %c0_i32_0 = arith.constant 0 : i32
    return %arg0, %c0_i32 : i32, i32
  }
}

</mosaic_0001>

<llo_original>
// kernel: tpu_custom_call.1
$region0: #{tpu_custom_call.1}
  #allocation0 [shape = 'u32[]', space=smem, size = 0x4, offset = 0x4, fixed_abs, tag = 'smem constant byte address 0x4 - core index']
  #allocation1 [shape = 'u32[144,128]{1,0:T(1,128)}', space=vmem, size = 0x12000, scoped, tag = 'internal scratch']
  %s0 = inlined_call_operand.vmem [shape: f32[2048,27], index: 0, kind: input, shape index: {}]
  %s1 = inlined_call_operand.vmem [shape: bf16[27,16], index: 1, kind: input, shape index: {}]
  %s2 = inlined_call_operand.vmem [shape: f32[1,16], index: 2, kind: input, shape index: {}]
  %s3 = inlined_call_operand.vmem [shape: f32[1,16], index: 3, kind: input, shape index: {}]
  %s4 = inlined_call_operand.vmem [shape: f32[2048,16], index: 4, kind: output, shape index: {}]
  %s5 = sld [smem:[#allocation0]]
  $region49: #{tpu_custom_call.1} parent=0
    _
  %s7 = ssub.s32 1, %s5
  %s8 = scalar_select 0, %s7, %s5
  loop: start=0, step=1, limit=10
  $region2: #{tpu_custom_call.1} parent=0 // loop_pre_header
    _
  $region3: #{tpu_custom_call.1} parent=0 // loop_header
    %s10 = sphi 0, %s14
    %p11 = scmp.ge.s32.totalorder %s10, 10
    %s20 = sphi 0, %s22
    %s23 = sphi 0, %s20
    %s24 = sphi 0, %s23
    %s40 = sphi 0, %s24
    %s44 = sphi 0, %s44
    %s46 = sphi 0, %s44
    %s47 = sphi 0, %s46
    %s61 = sphi 0, %s47
    %s65 = sphi 0, %s65
    %s67 = sphi 0, %s65
    %s68 = sphi 0, %s67
    %s82 = sphi 0, %s68
    %s86 = sphi 0, %s86
    %s88 = sphi 0, %s86
    %s89 = sphi 0, %s88
    %s103 = sphi 0, %s89
    %s109 = sphi 0, %s111
    %s112 = sphi 0, %s109
    %s113 = sphi 0, %s112
    %s129 = sphi 0, %s113
  $region4: #{tpu_custom_call.1} parent=0 // loop_header_branch
    %13 = sbr.rel (%p11) target = $region8
  $region5: #{tpu_custom_call.1} parent=0 // loop_body
    %s15 = ssub.s32 %s10, 1
    %s16 = ssub.s32 %s10, 2
    %s17 = sadd.s32 %s10, 1
    %s18 = ssub.s32 %s10, %s17
    %p19 = scmp.eq.s32.totalorder %s18, 0
    %s21 = sadd.s32 %s20, 1
    %s22 = scalar_select %p19, %s20, %s21
    %p25 = pneg %p19
    %p26 = scmp.eq.s32.totalorder %s10, 7
    %p27 = por %p25, %p26
    %p28 = scmp.ne.s32.totalorder %s20, %s23
    %p29 = scmp.eq.s32.totalorder %s10, 0
    %p30 = por %p28, %p29
    %p31 = scmp.ne.s32.totalorder %s20, %s23
    %p32 = scmp.eq.s32.totalorder %s15, 7
    %p33 = por %p31, %p32
    %p34 = scmp.ne.s32.totalorder %s23, %s24
    %p35 = scmp.eq.s32.totalorder %s15, 0
    %p36 = por %p34, %p35
    %p37 = scmp.ne.s32.totalorder %s23, %s24
    %p38 = scmp.eq.s32.totalorder %s16, 7
    %p39 = por %p37, %p38
    %p41 = scmp.ne.s32.totalorder %s24, %s40
    %p42 = scmp.eq.s32.totalorder %s16, 0
    %p43 = por %p41, %p42
    %s45 = sadd.s32 %s44, 1
    %p48 = scmp.eq.s32.totalorder %s10, 7
    %p49 = scmp.ne.s32.totalorder %s44, %s46
    %p50 = scmp.eq.s32.totalorder %s10, 0
    %p51 = por %p49, %p50
    %p52 = scmp.ne.s32.totalorder %s44, %s46
    %p53 = scmp.eq.s32.totalorder %s15, 7
    %p54 = por %p52, %p53
    %p55 = scmp.ne.s32.totalorder %s46, %s47
    %p56 = scmp.eq.s32.totalorder %s15, 0
    %p57 = por %p55, %p56
    %p58 = scmp.ne.s32.totalorder %s46, %s47
    %p59 = scmp.eq.s32.totalorder %s16, 7
    %p60 = por %p58, %p59
    %p62 = scmp.ne.s32.totalorder %s47, %s61
    %p63 = scmp.eq.s32.totalorder %s16, 0
    %p64 = por %p62, %p63
    %s66 = sadd.s32 %s65, 1
    %p69 = scmp.eq.s32.totalorder %s10, 7
    %p70 = scmp.ne.s32.totalorder %s65, %s67
    %p71 = scmp.eq.s32.totalorder %s10, 0
    %p72 = por %p70, %p71
    %p73 = scmp.ne.s32.totalorder %s65, %s67
    %p74 = scmp.eq.s32.totalorder %s15, 7
    %p75 = por %p73, %p74
    %p76 = scmp.ne.s32.totalorder %s67, %s68
    %p77 = scmp.eq.s32.totalorder %s15, 0
    %p78 = por %p76, %p77
    %p79 = scmp.ne.s32.totalorder %s67, %s68
    %p80 = scmp.eq.s32.totalorder %s16, 7
    %p81 = por %p79, %p80
    %p83 = scmp.ne.s32.totalorder %s68, %s82
    %p84 = scmp.eq.s32.totalorder %s16, 0
    %p85 = por %p83, %p84
    %s87 = sadd.s32 %s86, 1
    %p90 = scmp.eq.s32.totalorder %s10, 7
    %p91 = scmp.ne.s32.totalorder %s86, %s88
    %p92 = scmp.eq.s32.totalorder %s10, 0
    %p93 = por %p91, %p92
    %p94 = scmp.ne.s32.totalorder %s86, %s88
    %p95 = scmp.eq.s32.totalorder %s15, 7
    %p96 = por %p94, %p95
    %p97 = scmp.ne.s32.totalorder %s88, %s89
    %p98 = scmp.eq.s32.totalorder %s15, 0
    %p99 = por %p97, %p98
    %p100 = scmp.ne.s32.totalorder %s88, %s89
    %p101 = scmp.eq.s32.totalorder %s16, 7
    %p102 = por %p100, %p101
    %p104 = scmp.ne.s32.totalorder %s89, %s103
    %p105 = scmp.eq.s32.totalorder %s16, 0
    %p106 = por %p104, %p105
    %s107 = ssub.s32 %s10, %s17
    %p108 = scmp.eq.s32.totalorder %s107, 0
    %s110 = sadd.s32 %s109, 1
    %s111 = scalar_select %p108, %s109, %s110
    %p114 = pneg %p108
    %p115 = scmp.eq.s32.totalorder %s10, 7
    %p116 = por %p114, %p115
    %p117 = scmp.ne.s32.totalorder %s109, %s112
    %p118 = scmp.eq.s32.totalorder %s10, 0
    %p119 = por %p117, %p118
    %p120 = scmp.ne.s32.totalorder %s109, %s112
    %p121 = scmp.eq.s32.totalorder %s15, 7
    %p122 = por %p120, %p121
    %p123 = scmp.ne.s32.totalorder %s112, %s113
    %p124 = scmp.eq.s32.totalorder %s15, 0
    %p125 = por %p123, %p124
    %p126 = scmp.ne.s32.totalorder %s112, %s113
    %p127 = scmp.eq.s32.totalorder %s16, 7
    %p128 = por %p126, %p127
    %p130 = scmp.ne.s32.totalorder %s113, %s129
    %p131 = scmp.eq.s32.totalorder %s16, 0
    %p132 = por %p130, %p131
    %p133 = scmp.le.s32.totalorder 1, %s10
    %p134 = scmp.lt.s32.totalorder %s10, 9
    %p135 = pnand %p133, %p134
    %p136 = pneg %p135
    // Predicated region
    $region9: #{tpu_custom_call.1} parent=5 // pred_check
      _
    $region10: #{tpu_custom_call.1} parent=5 // pred_check_branch
      %138 = sbr.rel (%p135) target = $region12
    $region11: #{tpu_custom_call.1} parent=5 // pred_region
      %s139 = ssub.s32 %s10, 1
      // Predicated region
      $region13: #{tpu_custom_call.1} parent=11 // pred_check
        %p140 = pneg %p57
      $region14: #{tpu_custom_call.1} parent=11 // pred_check_branch
        %142 = sbr.rel (%p140) target = $region16
      $region15: #{tpu_custom_call.1} parent=11 // pred_region
        _
      $region16: #{tpu_custom_call.1} parent=11 // pred_fallthru
        _
      // Predicated region
      $region17: #{tpu_custom_call.1} parent=11 // pred_check
        %p143 = pneg %p78
      $region18: #{tpu_custom_call.1} parent=11 // pred_check_branch
        %145 = sbr.rel (%p143) target = $region20
      $region19: #{tpu_custom_call.1} parent=11 // pred_region
        _
      $region20: #{tpu_custom_call.1} parent=11 // pred_fallthru
        _
      // Predicated region
      $region21: #{tpu_custom_call.1} parent=11 // pred_check
        %p146 = pneg %p99
      $region22: #{tpu_custom_call.1} parent=11 // pred_check_branch
        %148 = sbr.rel (%p146) target = $region24
      $region23: #{tpu_custom_call.1} parent=11 // pred_region
        _
      $region24: #{tpu_custom_call.1} parent=11 // pred_fallthru
        _
    $region12: #{tpu_custom_call.1} parent=5 // pred_fallthru
      _
    %p149 = scmp.lt.s32.totalorder %s10, 8
    // Predicated region
    $region25: #{tpu_custom_call.1} parent=5 // pred_check
      %p150 = pneg %p149
    $region26: #{tpu_custom_call.1} parent=5 // pred_check_branch
      %152 = sbr.rel (%p150) target = $region28
    $region27: #{tpu_custom_call.1} parent=5 // pred_region
      // Predicated region
      $region29: #{tpu_custom_call.1} parent=27 // pred_check
        %p153 = pneg %p30
      $region30: #{tpu_custom_call.1} parent=27 // pred_check_branch
        %155 = sbr.rel (%p153) target = $region32
      $region31: #{tpu_custom_call.1} parent=27 // pred_region
        %s156 = smul.u32 32, %s10
        %p157 = scmp.lt.s32.totalorder %s156, 255
        %s158 = scalar_select %p157, %s156, 255
        %s159 = smul.addr %s158, 8
        %s160 = scalar_lea.vmem %s0, %s159
        %s161 = smul.u32 32, %s10
      $region32: #{tpu_custom_call.1} parent=27 // pred_fallthru
        _
    $region28: #{tpu_custom_call.1} parent=5 // pred_fallthru
      _
    %p162 = scmp.le.s32.totalorder 1, %s10
    %p163 = scmp.lt.s32.totalorder %s10, 9
    %p164 = pnand %p162, %p163
    %p165 = pneg %p164
    // Predicated region
    $region33: #{tpu_custom_call.1} parent=5 // pred_check
      _
    $region34: #{tpu_custom_call.1} parent=5 // pred_check_branch
      %167 = sbr.rel (%p164) target = $region36
    $region35: #{tpu_custom_call.1} parent=5 // pred_region
      %s168 = ssub.s32 %s10, 1
      %s169 = smul.u32 32, %s15
      %p170 = scmp.lt.s32.totalorder %s169, 255
      %s171 = scalar_select %p170, %s169, 255
      %s172 = smul.addr %s171, 8
      %s173 = scalar_lea.vmem %s0, %s172
      %p174 = pneg %p36
      %p175 = pneg %p33
      %p176 = pneg %p57
      %p177 = pneg %p54
      %p178 = pneg %p78
      %p179 = pneg %p75
      %p180 = pneg %p99
      %p181 = pneg %p96
      %p182 = pneg %p125
      %p183 = pneg %p122
      %s184 = smul.u32 32, %s15
      %p185 = scmp.lt.s32.totalorder %s184, 255
      %s186 = scalar_select %p185, %s184, 255
      %s187 = smul.addr %s186, 8
      %s188 = scalar_lea.vmem %s4, %s187
      %s189 = smul.u32 32, %s15
      %p190 = scmp.lt.s32.totalorder %s189, 255
      %s191 = scalar_select %p190, %s189, 255
      %s192 = smul.addr %s191, 8
      %s193 = scalar_lea.vmem %s0, %s192
      %s194 = smul.u32 32, %s15
      %s195 = smul.u32 32, %s15
      %p196 = scmp.lt.s32.totalorder %s195, 255
      %s197 = scalar_select %p196, %s195, 255
      %s198 = smul.addr %s197, 8
      %s199 = scalar_lea.vmem %s4, %s198
      %s200 = smul.u32 32, %s15
      %v202 = vld [vmem:[%s193] sm:$0xff]
      %v203 = vld [vmem:[%s193 + $0x8] sm:$0xff]
      %v204 = vld [vmem:[%s193 + $0x10] sm:$0xff]
      %v205 = vld [vmem:[%s193 + $0x18] sm:$0xff]
      %v206 = vld [vmem:[%s193 + $0x20] sm:$0xff]
      %v207 = vld [vmem:[%s193 + $0x28] sm:$0xff]
      %v208 = vld [vmem:[%s193 + $0x30] sm:$0xff]
      %v209 = vld [vmem:[%s193 + $0x38] sm:$0xff]
      %v210 = vld [vmem:[%s193 + $0x40] sm:$0xff]
      %v211 = vld [vmem:[%s193 + $0x48] sm:$0xff]
      %v212 = vld [vmem:[%s193 + $0x50] sm:$0xff]
      %v213 = vld [vmem:[%s193 + $0x58] sm:$0xff]
      %v214 = vld [vmem:[%s193 + $0x60] sm:$0xff]
      %v215 = vld [vmem:[%s193 + $0x68] sm:$0xff]
      %v216 = vld [vmem:[%s193 + $0x70] sm:$0xff]
      %v217 = vld [vmem:[%s193 + $0x78] sm:$0xff]
      %v218 = vld [vmem:[%s193 + $0x80] sm:$0xff]
      %v219 = vld [vmem:[%s193 + $0x88] sm:$0xff]
      %v220 = vld [vmem:[%s193 + $0x90] sm:$0xff]
      %v221 = vld [vmem:[%s193 + $0x98] sm:$0xff]
      %v222 = vld [vmem:[%s193 + $0xa0] sm:$0xff]
      %v223 = vld [vmem:[%s193 + $0xa8] sm:$0xff]
      %v224 = vld [vmem:[%s193 + $0xb0] sm:$0xff]
      %v225 = vld [vmem:[%s193 + $0xb8] sm:$0xff]
      %v226 = vld [vmem:[%s193 + $0xc0] sm:$0xff]
      %v227 = vld [vmem:[%s193 + $0xc8] sm:$0xff]
      %v228 = vld [vmem:[%s193 + $0xd0] sm:$0xff]
      %v229 = vld [vmem:[%s193 + $0xd8] sm:$0xff]
      %v230 = vld [vmem:[%s193 + $0xe0] sm:$0xff]
      %v231 = vld [vmem:[%s193 + $0xe8] sm:$0xff]
      %v232 = vld [vmem:[%s193 + $0xf0] sm:$0xff]
      %v233 = vld [vmem:[%s193 + $0xf8] sm:$0xff]
      %v234 = vpack.c.bf16 %v203, %v202
      %v235 = vpack.c.bf16 %v205, %v204
      %v236 = vpack.c.bf16 %v207, %v206
      %v237 = vpack.c.bf16 %v209, %v208
      %v238 = vpack.c.bf16 %v211, %v210
      %v239 = vpack.c.bf16 %v213, %v212
      %v240 = vpack.c.bf16 %v215, %v214
      %v241 = vpack.c.bf16 %v217, %v216
      %v242 = vpack.c.bf16 %v219, %v218
      %v243 = vpack.c.bf16 %v221, %v220
      %v244 = vpack.c.bf16 %v223, %v222
      %v245 = vpack.c.bf16 %v225, %v224
      %v246 = vpack.c.bf16 %v227, %v226
      %v247 = vpack.c.bf16 %v229, %v228
      %v248 = vpack.c.bf16 %v231, %v230
      %v249 = vpack.c.bf16 %v233, %v232
      %v250 = vld [vmem:[%s1] sm:$0xf]
      %v251 = vld [vmem:[%s1 + $0x4] sm:$0xf]
      %v252 = vld [vmem:[%s1 + $0x8] sm:$0xf]
      %v253 = vld [vmem:[%s1 + $0xc] sm:$0x3]
      %v258 = vunpack.c.l.b16 %v250
      %v259 = vunpack.c.l.b16 %v251
      %v260 = vunpack.c.l.b16 %v252
      %v261 = vunpack.c.l.b16 %v253
      %v262 = vpack.c.b16 %v259, %v258
      %v263 = vpack.c.b16 %v261, %v260
      %vm265 = vcmask 220160
      %v267 = vsel %vm265, %v234, 0
      %v270 = vsel %vm265, %v235, 0
      %v273 = vsel %vm265, %v236, 0
      %v276 = vsel %vm265, %v237, 0
      %v279 = vsel %vm265, %v238, 0
      %v282 = vsel %vm265, %v239, 0
      %v285 = vsel %vm265, %v240, 0
      %v288 = vsel %vm265, %v241, 0
      %v291 = vsel %vm265, %v242, 0
      %v294 = vsel %vm265, %v243, 0
      %v297 = vsel %vm265, %v244, 0
      %v300 = vsel %vm265, %v245, 0
      %v303 = vsel %vm265, %v246, 0
      %v306 = vsel %vm265, %v247, 0
      %v309 = vsel %vm265, %v248, 0
      %v312 = vsel %vm265, %v249, 0
      %vm314 = vcmask 1044480
      %vm315 = vcmask 1045504
      %v316 = vsel %vm314, 4294967295, 65535
      %v317 = vsel %vm315, %v316, 0
      %v319 = vand.u32 %v263, %v317
      %321 = vmatprep.subr.bf16.mxu0 0
      %322 = vmatpush1.bf16.msra.mxu0 %v262
      %323 = vmatprep.subr.bf16.mxu0 0
      %324 = vmatpush1.bf16.msra.mxu0 %v319
      %325 = vmatprep.subr.bf16.mxu0 0
      %326 = vmatpush1.bf16.msra.mxu0 0
      %327 = vmatprep.subr.bf16.mxu0 0
      %328 = vmatpush1.bf16.msra.mxu0 0
      %329 = vmatprep.subr.bf16.mxu0 0
      %330 = vmatpush1.bf16.msra.mxu0 0
      %331 = vmatprep.subr.bf16.mxu0 0
      %332 = vmatpush1.bf16.msra.mxu0 0
      %333 = vmatprep.subr.bf16.mxu0 0
      %334 = vmatpush1.bf16.msra.mxu0 0
      %335 = vmatprep.subr.bf16.mxu0 0
      %336 = vmatpush1.bf16.msra.mxu0 0
      %337 = vmatprep.subr.bf16.mxu0 0
      %338 = vmatpush1.bf16.msra.mxu0 0
      %339 = vmatprep.subr.bf16.mxu0 0
      %340 = vmatpush1.bf16.msra.mxu0 0
      %341 = vmatprep.subr.bf16.mxu0 0
      %342 = vmatpush1.bf16.msra.mxu0 0
      %343 = vmatprep.subr.bf16.mxu0 0
      %344 = vmatpush1.bf16.msra.mxu0 0
      %345 = vmatprep.subr.bf16.mxu0 0
      %346 = vmatpush1.bf16.msra.mxu0 0
      %347 = vmatprep.subr.bf16.mxu0 0
      %348 = vmatpush1.bf16.msra.mxu0 0
      %349 = vmatprep.subr.bf16.mxu0 0
      %350 = vmatpush1.bf16.msra.mxu0 0
      %351 = vmatprep.subr.bf16.mxu0 0
      %352 = vmatpush1.bf16.msra.mxu0 0
      %353 = vmatprep.mubr.bf16.mxu0 0
      %354 = vmatmul.mubr.bf16.gmra.mrb[0].mxu0 %v267
      %v355 = vpop.f32.mrb[0].mxu0
      %v356 = vadd.f32 0.0, %v355
      %v357 = vpop.f32.mrb[0].mxu0
      %v358 = vpop.f32.mrb[0].mxu0
      %v359 = vadd.f32 0.0, %v358
      %v360 = vpop.f32.mrb[0].mxu0
      %361 = vmatprep.mubr.bf16.mxu0 0
      %362 = vmatmul.mubr.bf16.gmra.mrb[0].mxu0 %v270
      %v363 = vpop.f32.mrb[0].mxu0
      %v364 = vadd.f32 0.0, %v363
      %v365 = vpop.f32.mrb[0].mxu0
      %v366 = vpop.f32.mrb[0].mxu0
      %v367 = vadd.f32 0.0, %v366
      %v368 = vpop.f32.mrb[0].mxu0
      %369 = vmatprep.mubr.bf16.mxu0 0
      %370 = vmatmul.mubr.bf16.gmra.mrb[0].mxu0 %v273
      %v371 = vpop.f32.mrb[0].mxu0
      %v372 = vadd.f32 0.0, %v371
      %v373 = vpop.f32.mrb[0].mxu0
      %v374 = vpop.f32.mrb[0].mxu0
      %v375 = vadd.f32 0.0, %v374
      %v376 = vpop.f32.mrb[0].mxu0
      %377 = vmatprep.mubr.bf16.mxu0 0
      %378 = vmatmul.mubr.bf16.gmra.mrb[0].mxu0 %v276
      %v379 = vpop.f32.mrb[0].mxu0
      %v380 = vadd.f32 0.0, %v379
      %v381 = vpop.f32.mrb[0].mxu0
      %v382 = vpop.f32.mrb[0].mxu0
      %v383 = vadd.f32 0.0, %v382
      %v384 = vpop.f32.mrb[0].mxu0
      %385 = vmatprep.mubr.bf16.mxu0 0
      %386 = vmatmul.mubr.bf16.gmra.mrb[0].mxu0 %v279
      %v387 = vpop.f32.mrb[0].mxu0
      %v388 = vadd.f32 0.0, %v387
      %v389 = vpop.f32.mrb[0].mxu0
      %v390 = vpop.f32.mrb[0].mxu0
      %v391 = vadd.f32 0.0, %v390
      %v392 = vpop.f32.mrb[0].mxu0
      %393 = vmatprep.mubr.bf16.mxu0 0
      %394 = vmatmul.mubr.bf16.gmra.mrb[0].mxu0 %v282
      %v395 = vpop.f32.mrb[0].mxu0
      %v396 = vadd.f32 0.0, %v395
      %v397 = vpop.f32.mrb[0].mxu0
      %v398 = vpop.f32.mrb[0].mxu0
      %v399 = vadd.f32 0.0, %v398
      %v400 = vpop.f32.mrb[0].mxu0
      %401 = vmatprep.mubr.bf16.mxu0 0
      %402 = vmatmul.mubr.bf16.gmra.mrb[0].mxu0 %v285
      %v403 = vpop.f32.mrb[0].mxu0
      %v404 = vadd.f32 0.0, %v403
      %v405 = vpop.f32.mrb[0].mxu0
      %v406 = vpop.f32.mrb[0].mxu0
      %v407 = vadd.f32 0.0, %v406
      %v408 = vpop.f32.mrb[0].mxu0
      %409 = vmatprep.mubr.bf16.mxu0 0
      %410 = vmatmul.mubr.bf16.gmra.mrb[0].mxu0 %v288
      %v411 = vpop.f32.mrb[0].mxu0
      %v412 = vadd.f32 0.0, %v411
      %v413 = vpop.f32.mrb[0].mxu0
      %v414 = vpop.f32.mrb[0].mxu0
      %v415 = vadd.f32 0.0, %v414
      %v416 = vpop.f32.mrb[0].mxu0
      %417 = vmatprep.mubr.bf16.mxu0 0
      %418 = vmatmul.mubr.bf16.gmra.mrb[0].mxu0 %v291
      %v419 = vpop.f32.mrb[0].mxu0
      %v420 = vadd.f32 0.0, %v419
      %v421 = vpop.f32.mrb[0].mxu0
      %v422 = vpop.f32.mrb[0].mxu0
      %v423 = vadd.f32 0.0, %v422
      %v424 = vpop.f32.mrb[0].mxu0
      %425 = vmatprep.mubr.bf16.mxu0 0
      %426 = vmatmul.mubr.bf16.gmra.mrb[0].mxu0 %v294
      %v427 = vpop.f32.mrb[0].mxu0
      %v428 = vadd.f32 0.0, %v427
      %v429 = vpop.f32.mrb[0].mxu0
      %v430 = vpop.f32.mrb[0].mxu0
      %v431 = vadd.f32 0.0, %v430
      %v432 = vpop.f32.mrb[0].mxu0
      %433 = vmatprep.mubr.bf16.mxu0 0
      %434 = vmatmul.mubr.bf16.gmra.mrb[0].mxu0 %v297
      %v435 = vpop.f32.mrb[0].mxu0
      %v436 = vadd.f32 0.0, %v435
      %v437 = vpop.f32.mrb[0].mxu0
      %v438 = vpop.f32.mrb[0].mxu0
      %v439 = vadd.f32 0.0, %v438
      %v440 = vpop.f32.mrb[0].mxu0
      %441 = vmatprep.mubr.bf16.mxu0 0
      %442 = vmatmul.mubr.bf16.gmra.mrb[0].mxu0 %v300
      %v443 = vpop.f32.mrb[0].mxu0
      %v444 = vadd.f32 0.0, %v443
      %v445 = vpop.f32.mrb[0].mxu0
      %v446 = vpop.f32.mrb[0].mxu0
      %v447 = vadd.f32 0.0, %v446
      %v448 = vpop.f32.mrb[0].mxu0
      %449 = vmatprep.mubr.bf16.mxu0 0
      %450 = vmatmul.mubr.bf16.gmra.mrb[0].mxu0 %v303
      %v451 = vpop.f32.mrb[0].mxu0
      %v452 = vadd.f32 0.0, %v451
      %v453 = vpop.f32.mrb[0].mxu0
      %v454 = vpop.f32.mrb[0].mxu0
      %v455 = vadd.f32 0.0, %v454
      %v456 = vpop.f32.mrb[0].mxu0
      %457 = vmatprep.mubr.bf16.mxu0 0
      %458 = vmatmul.mubr.bf16.gmra.mrb[0].mxu0 %v306
      %v459 = vpop.f32.mrb[0].mxu0
      %v460 = vadd.f32 0.0, %v459
      %v461 = vpop.f32.mrb[0].mxu0
      %v462 = vpop.f32.mrb[0].mxu0
      %v463 = vadd.f32 0.0, %v462
      %v464 = vpop.f32.mrb[0].mxu0
      %465 = vmatprep.mubr.bf16.mxu0 0
      %466 = vmatmul.mubr.bf16.gmra.mrb[0].mxu0 %v309
      %v467 = vpop.f32.mrb[0].mxu0
      %v468 = vadd.f32 0.0, %v467
      %v469 = vpop.f32.mrb[0].mxu0
      %v470 = vpop.f32.mrb[0].mxu0
      %v471 = vadd.f32 0.0, %v470
      %v472 = vpop.f32.mrb[0].mxu0
      %473 = vmatprep.mubr.bf16.mxu0 0
      %474 = vmatmul.mubr.bf16.gmra.mrb[0].mxu0 %v312
      %v475 = vpop.f32.mrb[0].mxu0
      %v476 = vadd.f32 0.0, %v475
      %v477 = vpop.f32.mrb[0].mxu0
      %v478 = vpop.f32.mrb[0].mxu0
      %v479 = vadd.f32 0.0, %v478
      %v480 = vpop.f32.mrb[0].mxu0
      %481 = vdwg.mxu0
      %v482 = vld [vmem:[%s2] sm:$0x1]
      %v484 = vlaneseq
      %v485 = vshrl.u32 %v484, 7
      %v486 = vsub.s32 0, %v485
      %v487 = vrot.slane %v482, %v486
      %v489 = vmul.f32 %v356, %v487
      %v490 = vmul.f32 %v359, %v487
      %v491 = vmul.f32 %v364, %v487
      %v492 = vmul.f32 %v367, %v487
      %v493 = vmul.f32 %v372, %v487
      %v494 = vmul.f32 %v375, %v487
      %v495 = vmul.f32 %v380, %v487
      %v496 = vmul.f32 %v383, %v487
      %v497 = vmul.f32 %v388, %v487
      %v498 = vmul.f32 %v391, %v487
      %v499 = vmul.f32 %v396, %v487
      %v500 = vmul.f32 %v399, %v487
      %v501 = vmul.f32 %v404, %v487
      %v502 = vmul.f32 %v407, %v487
      %v503 = vmul.f32 %v412, %v487
      %v504 = vmul.f32 %v415, %v487
      %v505 = vmul.f32 %v420, %v487
      %v506 = vmul.f32 %v423, %v487
      %v507 = vmul.f32 %v428, %v487
      %v508 = vmul.f32 %v431, %v487
      %v509 = vmul.f32 %v436, %v487
      %v510 = vmul.f32 %v439, %v487
      %v511 = vmul.f32 %v444, %v487
      %v512 = vmul.f32 %v447, %v487
      %v513 = vmul.f32 %v452, %v487
      %v514 = vmul.f32 %v455, %v487
      %v515 = vmul.f32 %v460, %v487
      %v516 = vmul.f32 %v463, %v487
      %v517 = vmul.f32 %v468, %v487
      %v518 = vmul.f32 %v471, %v487
      %v519 = vmul.f32 %v476, %v487
      %v520 = vmul.f32 %v479, %v487
      %v521 = vld [vmem:[%s3] sm:$0x1]
      %v523 = vlaneseq
      %v524 = vshrl.u32 %v523, 7
      %v525 = vsub.s32 0, %v524
      %v526 = vrot.slane %v521, %v525
      %v528 = vadd.f32 %v489, %v526
      %v529 = vadd.f32 %v490, %v526
      %v530 = vadd.f32 %v491, %v526
      %v531 = vadd.f32 %v492, %v526
      %v532 = vadd.f32 %v493, %v526
      %v533 = vadd.f32 %v494, %v526
      %v534 = vadd.f32 %v495, %v526
      %v535 = vadd.f32 %v496, %v526
      %v536 = vadd.f32 %v497, %v526
      %v537 = vadd.f32 %v498, %v526
      %v538 = vadd.f32 %v499, %v526
      %v539 = vadd.f32 %v500, %v526
      %v540 = vadd.f32 %v501, %v526
      %v541 = vadd.f32 %v502, %v526
      %v542 = vadd.f32 %v503, %v526
      %v543 = vadd.f32 %v504, %v526
      %v544 = vadd.f32 %v505, %v526
      %v545 = vadd.f32 %v506, %v526
      %v546 = vadd.f32 %v507, %v526
      %v547 = vadd.f32 %v508, %v526
      %v548 = vadd.f32 %v509, %v526
      %v549 = vadd.f32 %v510, %v526
      %v550 = vadd.f32 %v511, %v526
      %v551 = vadd.f32 %v512, %v526
      %v552 = vadd.f32 %v513, %v526
      %v553 = vadd.f32 %v514, %v526
      %v554 = vadd.f32 %v515, %v526
      %v555 = vadd.f32 %v516, %v526
      %v556 = vadd.f32 %v517, %v526
      %v557 = vadd.f32 %v518, %v526
      %v558 = vadd.f32 %v519, %v526
      %v559 = vadd.f32 %v520, %v526
      %v560 = vmax.f32 %v528, 0.0
      %v561 = vmax.f32 %v529, 0.0
      %v562 = vmax.f32 %v530, 0.0
      %v563 = vmax.f32 %v531, 0.0
      %v564 = vmax.f32 %v532, 0.0
      %v565 = vmax.f32 %v533, 0.0
      %v566 = vmax.f32 %v534, 0.0
      %v567 = vmax.f32 %v535, 0.0
      %v568 = vmax.f32 %v536, 0.0
      %v569 = vmax.f32 %v537, 0.0
      %v570 = vmax.f32 %v538, 0.0
      %v571 = vmax.f32 %v539, 0.0
      %v572 = vmax.f32 %v540, 0.0
      %v573 = vmax.f32 %v541, 0.0
      %v574 = vmax.f32 %v542, 0.0
      %v575 = vmax.f32 %v543, 0.0
      %v576 = vmax.f32 %v544, 0.0
      %v577 = vmax.f32 %v545, 0.0
      %v578 = vmax.f32 %v546, 0.0
      %v579 = vmax.f32 %v547, 0.0
      %v580 = vmax.f32 %v548, 0.0
      %v581 = vmax.f32 %v549, 0.0
      %v582 = vmax.f32 %v550, 0.0
      %v583 = vmax.f32 %v551, 0.0
      %v584 = vmax.f32 %v552, 0.0
      %v585 = vmax.f32 %v553, 0.0
      %v586 = vmax.f32 %v554, 0.0
      %v587 = vmax.f32 %v555, 0.0
      %v588 = vmax.f32 %v556, 0.0
      %v589 = vmax.f32 %v557, 0.0
      %v590 = vmax.f32 %v558, 0.0
      %v591 = vmax.f32 %v559, 0.0
      %vm592 = vcmask 130048
      %593 = vst.msk [vmem:[%s199] sm:$0xff] %vm592, %v560
      %594 = vst.msk [vmem:[%s199 + $0x8] sm:$0xff] %vm592, %v561
      %595 = vst.msk [vmem:[%s199 + $0x10] sm:$0xff] %vm592, %v562
      %596 = vst.msk [vmem:[%s199 + $0x18] sm:$0xff] %vm592, %v563
      %597 = vst.msk [vmem:[%s199 + $0x20] sm:$0xff] %vm592, %v564
      %598 = vst.msk [vmem:[%s199 + $0x28] sm:$0xff] %vm592, %v565
      %599 = vst.msk [vmem:[%s199 + $0x30] sm:$0xff] %vm592, %v566
      %600 = vst.msk [vmem:[%s199 + $0x38] sm:$0xff] %vm592, %v567
      %601 = vst.msk [vmem:[%s199 + $0x40] sm:$0xff] %vm592, %v568
      %602 = vst.msk [vmem:[%s199 + $0x48] sm:$0xff] %vm592, %v569
      %603 = vst.msk [vmem:[%s199 + $0x50] sm:$0xff] %vm592, %v570
      %604 = vst.msk [vmem:[%s199 + $0x58] sm:$0xff] %vm592, %v571
      %605 = vst.msk [vmem:[%s199 + $0x60] sm:$0xff] %vm592, %v572
      %606 = vst.msk [vmem:[%s199 + $0x68] sm:$0xff] %vm592, %v573
      %607 = vst.msk [vmem:[%s199 + $0x70] sm:$0xff] %vm592, %v574
      %608 = vst.msk [vmem:[%s199 + $0x78] sm:$0xff] %vm592, %v575
      %609 = vst.msk [vmem:[%s199 + $0x80] sm:$0xff] %vm592, %v576
      %610 = vst.msk [vmem:[%s199 + $0x88] sm:$0xff] %vm592, %v577
      %611 = vst.msk [vmem:[%s199 + $0x90] sm:$0xff] %vm592, %v578
      %612 = vst.msk [vmem:[%s199 + $0x98] sm:$0xff] %vm592, %v579
      %613 = vst.msk [vmem:[%s199 + $0xa0] sm:$0xff] %vm592, %v580
      %614 = vst.msk [vmem:[%s199 + $0xa8] sm:$0xff] %vm592, %v581
      %615 = vst.msk [vmem:[%s199 + $0xb0] sm:$0xff] %vm592, %v582
      %616 = vst.msk [vmem:[%s199 + $0xb8] sm:$0xff] %vm592, %v583
      %617 = vst.msk [vmem:[%s199 + $0xc0] sm:$0xff] %vm592, %v584
      %618 = vst.msk [vmem:[%s199 + $0xc8] sm:$0xff] %vm592, %v585
      %619 = vst.msk [vmem:[%s199 + $0xd0] sm:$0xff] %vm592, %v586
      %620 = vst.msk [vmem:[%s199 + $0xd8] sm:$0xff] %vm592, %v587
      %621 = vst.msk [vmem:[%s199 + $0xe0] sm:$0xff] %vm592, %v588
      %622 = vst.msk [vmem:[%s199 + $0xe8] sm:$0xff] %vm592, %v589
      %623 = vst.msk [vmem:[%s199 + $0xf0] sm:$0xff] %vm592, %v590
      %624 = vst.msk [vmem:[%s199 + $0xf8] sm:$0xff] %vm592, %v591
      %s625 = smul.u32 32, %s15
      %p626 = scmp.lt.s32.totalorder %s625, 255
      %s627 = scalar_select %p626, %s625, 255
      %s628 = smul.addr %s627, 8
      %s629 = scalar_lea.vmem %s4, %s628
      // Predicated region
      $region37: #{tpu_custom_call.1} parent=35 // pred_check
        %p630 = pneg %p122
      $region38: #{tpu_custom_call.1} parent=35 // pred_check_branch
        %632 = sbr.rel (%p630) target = $region40
      $region39: #{tpu_custom_call.1} parent=35 // pred_region
        %s633 = smul.u32 32, %s15
      $region40: #{tpu_custom_call.1} parent=35 // pred_fallthru
        _
    $region36: #{tpu_custom_call.1} parent=5 // pred_fallthru
      _
    %p634 = scmp.le.s32.totalorder 2, %s10
    // Predicated region
    $region41: #{tpu_custom_call.1} parent=5 // pred_check
      %p635 = pneg %p634
    $region42: #{tpu_custom_call.1} parent=5 // pred_check_branch
      %637 = sbr.rel (%p635) target = $region44
    $region43: #{tpu_custom_call.1} parent=5 // pred_region
      %s638 = ssub.s32 %s10, 2
      // Predicated region
      $region45: #{tpu_custom_call.1} parent=43 // pred_check
        %p639 = pneg %p128
      $region46: #{tpu_custom_call.1} parent=43 // pred_check_branch
        %641 = sbr.rel (%p639) target = $region48
      $region47: #{tpu_custom_call.1} parent=43 // pred_region
        %s642 = smul.u32 32, %s16
        %p643 = scmp.lt.s32.totalorder %s642, 255
        %s644 = scalar_select %p643, %s642, 255
        %s645 = smul.addr %s644, 8
        %s646 = scalar_lea.vmem %s4, %s645
      $region48: #{tpu_custom_call.1} parent=43 // pred_fallthru
        _
    $region44: #{tpu_custom_call.1} parent=5 // pred_fallthru
      _
  $region6: #{tpu_custom_call.1} parent=0 // loop_footer
    %s14 = sadd.s32 1, %s10
  $region7: #{tpu_custom_call.1} parent=0 // loop_footer_branch
    %9 = sbr.rel target = $region3
  $region8: #{tpu_custom_call.1} parent=0 // loop_exit
    _

</llo_original>
